<compile_context>
chip_gen: v7x
topology: tpu7x:2x2x1
jax: 0.10.0
libtpu: 0.0.40
codegen_flags: <defaults>
</compile_context>

<pallas_src>
import functools

import jax
import jax.numpy as jnp
from jax import lax
from jax.experimental import pallas as pl
from jax.experimental.pallas import tpu as pltpu


# ----------------------------------------------------------------------------
# Pallas kernel: fused dilated-3x3 (+folded 1x1 + BN) stencil matmul, bias, ReLU
# ----------------------------------------------------------------------------
def mep_kernel(x_ref, w_ref, b_ref, ml_ref, mr_ref, o_ref, *, d, W):
    """x_ref : (Cin, S2)  bf16   -- H-padded, row-flattened slab (+d zeros each end)
       w_ref : (9, Cout, Cin) bf16 -- merged/scaled weights (tap-major)
       b_ref : (Cout, 1) f32      -- merged bias
       ml/mr : (1, S) bf16        -- 0/1 masks for left / right shifted taps
       o_ref : (Cout, S) f32      -- lane-dense output tile (S = tile_rows * W)
    """
    cout, S = o_ref.shape
    x = x_ref[...]                       # (Cin, S2) bf16
    wm = w_ref[...]                      # (9, Cout, Cin) bf16

    acc = jnp.zeros((cout, S), dtype=jnp.float32)
    for ky in range(3):
        for kx in range(3):
            start = d * (ky * W + kx)            # static lane offset of this tap
            xt = x[:, start:start + S]           # (Cin, S) bf16
            if kx == 0:                          # tap looks d columns to the left
                xt = xt * ml_ref[...]
            elif kx == 2:                        # tap looks d columns to the right
                xt = xt * mr_ref[...]
            acc = acc + jnp.dot(wm[ky * 3 + kx], xt,
                                preferred_element_type=jnp.float32)

    y = acc + b_ref[...]                         # fused bias (b3 + b1)
    o_ref[...] = jnp.maximum(y, 0.0).astype(o_ref.dtype)


def _pick_tile_rows(H, W, max_pixels=4096):
    """Largest row-tile th | H with th*W a multiple of 128 and <= max_pixels;
       falls back to the full image (always legal since it equals the full extent)."""
    if H * W <= max_pixels:
        return H
    best = None
    for th in range(1, H + 1):
        if H % th:
            continue
        if (th * W) % 128:
            continue
        if th * W > max_pixels:
            continue
        best = th
    return best if best is not None else H


def mep_cover_pallas(x_nchw, w3, w1, s3, b3, s1, b1, *, dilation, tile_rows=None):
    """x_nchw: (N, Cin, H, W) f32. w3: (3,3,Cin,Cout). w1: (Cin,Cout).
       s*/b*: (Cout,) eval-mode BN scale/shift. Returns (N, Cout, H, W) f32."""
    N, Cin, H, W = x_nchw.shape
    Cout = w3.shape[-1]
    d = int(dilation)

    th = _pick_tile_rows(H, W) if tile_rows is None else int(tile_rows)
    assert H % th == 0
    n_tiles = H // th
    S = th * W                                   # output pixels per grid step (lane axis)
    S2 = (th + 2 * d) * W + 2 * d                # haloed, flattened input slab length

    # --- fold 1x1 branch + BN into a single (9, Cout, Cin) weight + bias ------
    w3s = w3 * s3[None, None, None, :]           # scale 3x3 columns by BN3 scale
    w1s = w1 * s1[None, :]                       # scale 1x1 columns by BN1 scale
    wm = w3s.reshape(9, Cin, Cout)
    wm = wm.at[4].add(w1s)                       # center tap (ky=1, kx=1) carries the 1x1 conv
    wm = jnp.transpose(wm, (0, 2, 1)).astype(jnp.bfloat16)          # (9, Cout, Cin)
    bias = (b3 + b1).astype(jnp.float32).reshape(Cout, 1)

    # --- build the haloed, lane-flattened input slabs (no 9x im2col) ----------
    xb = x_nchw.astype(jnp.bfloat16)                                # halve HBM traffic
    xh = jnp.pad(xb, ((0, 0), (0, 0), (d, d), (0, 0)))              # pad H only
    slabs = [xh[:, :, r * th:r * th + th + 2 * d, :] for r in range(n_tiles)]
    xt = jnp.stack(slabs, axis=1)                                   # (N, nt, Cin, th+2d, W)
    xt = xt.reshape(N, n_tiles, Cin, (th + 2 * d) * W)
    xt2 = jnp.pad(xt, ((0, 0), (0, 0), (0, 0), (d, d)))             # (N, nt, Cin, S2)

    # 0/1 masks zeroing horizontally out-of-range taps (W padding is virtual).
    col = jnp.tile(jnp.arange(W), th)
    m_left = (col >= d).astype(jnp.bfloat16).reshape(1, S)          # for kx == 0
    m_right = (col < W - d).astype(jnp.bfloat16).reshape(1, S)      # for kx == 2

    grid = (N, n_tiles)
    kernel = functools.partial(mep_kernel, d=d, W=W)

    out_flat = pl.pallas_call(
        kernel,
        out_shape=jax.ShapeDtypeStruct((N, Cout, H * W), jnp.float32),
        grid_spec=pltpu.PrefetchScalarGridSpec(
            num_scalar_prefetch=0,
            grid=grid,
            in_specs=[
                pl.BlockSpec((None, None, Cin, S2), lambda n, r: (n, r, 0, 0)),  # input slab
                pl.BlockSpec((9, Cout, Cin), lambda n, r: (0, 0, 0)),            # merged W
                pl.BlockSpec((Cout, 1), lambda n, r: (0, 0)),                    # merged bias
                pl.BlockSpec((1, S), lambda n, r: (0, 0)),                       # left mask
                pl.BlockSpec((1, S), lambda n, r: (0, 0)),                       # right mask
            ],
            out_specs=pl.BlockSpec((None, Cout, S), lambda n, r: (n, 0, r)),     # lane-dense
        ),
        compiler_params=pltpu.CompilerParams(
            dimension_semantics=("parallel", "parallel")),
    )(xt2, wm, bias, m_left, m_right)

    return out_flat.reshape(N, Cout, H, W)        # free reshape: already channel-major


# ----------------------------------------------------------------------------
# Pure-JAX f32 reference (module math via lax.conv) for the correctness check
# ----------------------------------------------------------------------------
def mep_cover_ref(x_nchw, w3, w1, s3, b3, s1, b1, *, dilation):
    d = dilation
    w3_oihw = jnp.transpose(w3, (3, 2, 0, 1))                 # (Cout,Cin,3,3)
    w1_oihw = jnp.transpose(w1, (1, 0))[:, :, None, None]     # (Cout,Cin,1,1)
    out3 = lax.conv_general_dilated(
        x_nchw, w3_oihw, window_strides=(1, 1),
        padding=[(d, d), (d, d)], rhs_dilation=(d, d),
        dimension_numbers=("NCHW", "OIHW", "NCHW"))
    out1 = lax.conv_general_dilated(
        x_nchw, w1_oihw, window_strides=(1, 1),
        padding=[(0, 0), (0, 0)],
        dimension_numbers=("NCHW", "OIHW", "NCHW"))
    bn3 = out3 * s3[None, :, None, None] + b3[None, :, None, None]
    bn1 = out1 * s1[None, :, None, None] + b1[None, :, None, None]
    return jnp.maximum(bn3 + bn1, 0.0)


if __name__ == "__main__":
    # Small shapes consistent with the module: batch=2, in_ch=4, out_ch=8, 16x16, dilation=2.
    N, Cin, Cout, H, W, dil = 2, 4, 8, 16, 16, 2

    key = jax.random.PRNGKey(0)
    kx_, kw3, kw1 = jax.random.split(key, 3)

    x = jax.random.normal(kx_, (N, Cin, H, W), dtype=jnp.float32)
    w3 = 0.1 * jax.random.normal(kw3, (3, 3, Cin, Cout), dtype=jnp.float32)
    w1 = 0.1 * jax.random.normal(kw1, (Cin, Cout), dtype=jnp.float32)

    eps = 1e-5
    ar = jnp.arange(Cout, dtype=jnp.float32)
    gamma3, beta3 = 1.0 + 0.10 * ar, 0.05 * ar
    mean3, var3 = 0.01 * ar, 1.0 + 0.02 * ar
    gamma1, beta1 = 1.0 - 0.05 * ar, -0.03 * ar
    mean1, var1 = -0.02 * ar, 1.0 + 0.01 * ar

    # Fold BN (eval mode) into per-channel scale/shift.
    s3 = gamma3 / jnp.sqrt(var3 + eps)
    b3 = beta3 - mean3 * s3
    s1 = gamma1 / jnp.sqrt(var1 + eps)
    b1 = beta1 - mean1 * s1

    run = jax.jit(functools.partial(mep_cover_pallas, dilation=dil))
    out = jax.block_until_ready(run(x, w3, w1, s3, b3, s1, b1))

    ref = mep_cover_ref(x, w3, w1, s3, b3, s1, b1, dilation=dil)
    assert out.shape == (N, Cout, H, W)
    max_err = float(jnp.max(jnp.abs(out - ref)))
    # Tolerance accounts for bf16 (2^-9) rounding of the matmul operands (f32 accumulate);
    # any structural/weight-folding bug would produce O(1) errors and still be caught.
    assert jnp.allclose(out, ref, atol=5e-2, rtol=5e-2), max_err

    print("KERNEL_OK")
</pallas_src>

<mosaic_0001>
module attributes {stable_mosaic.version = 11 : i64} {
  func.func @mep_kernel(%arg0: i32, %arg1: i32, %arg2: memref<1x1x4x324xbf16, #tpu.memory_space<vmem>>, %arg3: memref<9x8x4xbf16, #tpu.memory_space<vmem>>, %arg4: memref<8x1xf32, #tpu.memory_space<vmem>>, %arg5: memref<1x256xbf16, #tpu.memory_space<vmem>>, %arg6: memref<1x256xbf16, #tpu.memory_space<vmem>>, %arg7: memref<1x8x256xf32, #tpu.memory_space<vmem>>) attributes {dimension_semantics = [#tpu.dimension_semantics<parallel>, #tpu.dimension_semantics<parallel>], iteration_bounds = array<i64: 2, 1>, scalar_prefetch = 0 : i64, scratch_operands = 0 : i64, tpu.core_type = #tpu.core_type<tc>, window_params = [{transform_indices = @transform_0, window_bounds = array<i64: 1, 1, 4, 324>}, {pipeline_mode = #tpu.pipeline_mode<synchronous>, transform_indices = @transform_1, window_bounds = array<i64: 9, 8, 4>}, {pipeline_mode = #tpu.pipeline_mode<synchronous>, transform_indices = @transform_2, window_bounds = array<i64: 8, 1>}, {pipeline_mode = #tpu.pipeline_mode<synchronous>, transform_indices = @transform_3, window_bounds = array<i64: 1, 256>}, {pipeline_mode = #tpu.pipeline_mode<synchronous>, transform_indices = @transform_4, window_bounds = array<i64: 1, 256>}, {transform_indices = @transform_5, window_bounds = array<i64: 1, 8, 256>}]} {
    %c0 = arith.constant 0 : index
    %c0_0 = arith.constant 0 : index
    %c0_1 = arith.constant 0 : index
    %c0_2 = arith.constant 0 : index
    %0 = vector.load %arg2[%c0, %c0_0, %c0_1, %c0_2] : memref<1x1x4x324xbf16, #tpu.memory_space<vmem>>, vector<1x1x4x324xbf16>
    %1 = vector.shape_cast %0 : vector<1x1x4x324xbf16> to vector<4x324xbf16>
    %c0_3 = arith.constant 0 : index
    %c0_4 = arith.constant 0 : index
    %c0_5 = arith.constant 0 : index
    %2 = vector.load %arg3[%c0_3, %c0_4, %c0_5] : memref<9x8x4xbf16, #tpu.memory_space<vmem>>, vector<9x8x4xbf16>
    %cst = arith.constant 0.000000e+00 : f32
    %3 = vector.broadcast %cst : f32 to vector<8x256xf32>
    %4 = vector.extract_strided_slice %1 {offsets = [0, 0], sizes = [4, 256], strides = [1, 1]} : vector<4x324xbf16> to vector<4x256xbf16>
    %c0_6 = arith.constant 0 : index
    %c0_7 = arith.constant 0 : index
    %5 = vector.load %arg5[%c0_6, %c0_7] : memref<1x256xbf16, #tpu.memory_space<vmem>>, vector<1x256xbf16>
    %6 = vector.broadcast %5 : vector<1x256xbf16> to vector<4x256xbf16>
    %7 = arith.mulf %4, %6 : vector<4x256xbf16>
    %8 = vector.extract_strided_slice %2 {offsets = [0, 0, 0], sizes = [1, 8, 4], strides = [1, 1, 1]} : vector<9x8x4xbf16> to vector<1x8x4xbf16>
    %9 = vector.shape_cast %8 : vector<1x8x4xbf16> to vector<8x4xbf16>
    %cst_8 = arith.constant dense<0.000000e+00> : vector<8x256xf32>
    %10 = tpu.matmul %9, %7, %cst_8 {dimension_numbers = #tpu.dot_dimension_numbers<[1], [0], [0], [1], [0, 0, 1, 1], [], []>} : vector<8x4xbf16>, vector<4x256xbf16>, vector<8x256xf32> -> vector<8x256xf32>
    %11 = arith.addf %3, %10 : vector<8x256xf32>
    %12 = vector.extract_strided_slice %1 {offsets = [0, 2], sizes = [4, 256], strides = [1, 1]} : vector<4x324xbf16> to vector<4x256xbf16>
    %13 = vector.extract_strided_slice %2 {offsets = [1, 0, 0], sizes = [1, 8, 4], strides = [1, 1, 1]} : vector<9x8x4xbf16> to vector<1x8x4xbf16>
    %14 = vector.shape_cast %13 : vector<1x8x4xbf16> to vector<8x4xbf16>
    %cst_9 = arith.constant dense<0.000000e+00> : vector<8x256xf32>
    %15 = tpu.matmul %14, %12, %cst_9 {dimension_numbers = #tpu.dot_dimension_numbers<[1], [0], [0], [1], [0, 0, 1, 1], [], []>} : vector<8x4xbf16>, vector<4x256xbf16>, vector<8x256xf32> -> vector<8x256xf32>
    %16 = arith.addf %11, %15 : vector<8x256xf32>
    %17 = vector.extract_strided_slice %1 {offsets = [0, 4], sizes = [4, 256], strides = [1, 1]} : vector<4x324xbf16> to vector<4x256xbf16>
    %c0_10 = arith.constant 0 : index
    %c0_11 = arith.constant 0 : index
    %18 = vector.load %arg6[%c0_10, %c0_11] : memref<1x256xbf16, #tpu.memory_space<vmem>>, vector<1x256xbf16>
    %19 = vector.broadcast %18 : vector<1x256xbf16> to vector<4x256xbf16>
    %20 = arith.mulf %17, %19 : vector<4x256xbf16>
    %21 = vector.extract_strided_slice %2 {offsets = [2, 0, 0], sizes = [1, 8, 4], strides = [1, 1, 1]} : vector<9x8x4xbf16> to vector<1x8x4xbf16>
    %22 = vector.shape_cast %21 : vector<1x8x4xbf16> to vector<8x4xbf16>
    %cst_12 = arith.constant dense<0.000000e+00> : vector<8x256xf32>
    %23 = tpu.matmul %22, %20, %cst_12 {dimension_numbers = #tpu.dot_dimension_numbers<[1], [0], [0], [1], [0, 0, 1, 1], [], []>} : vector<8x4xbf16>, vector<4x256xbf16>, vector<8x256xf32> -> vector<8x256xf32>
    %24 = arith.addf %16, %23 : vector<8x256xf32>
    %25 = vector.extract_strided_slice %1 {offsets = [0, 32], sizes = [4, 256], strides = [1, 1]} : vector<4x324xbf16> to vector<4x256xbf16>
    %c0_13 = arith.constant 0 : index
    %c0_14 = arith.constant 0 : index
    %26 = vector.load %arg5[%c0_13, %c0_14] : memref<1x256xbf16, #tpu.memory_space<vmem>>, vector<1x256xbf16>
    %27 = vector.broadcast %26 : vector<1x256xbf16> to vector<4x256xbf16>
    %28 = arith.mulf %25, %27 : vector<4x256xbf16>
    %29 = vector.extract_strided_slice %2 {offsets = [3, 0, 0], sizes = [1, 8, 4], strides = [1, 1, 1]} : vector<9x8x4xbf16> to vector<1x8x4xbf16>
    %30 = vector.shape_cast %29 : vector<1x8x4xbf16> to vector<8x4xbf16>
    %cst_15 = arith.constant dense<0.000000e+00> : vector<8x256xf32>
    %31 = tpu.matmul %30, %28, %cst_15 {dimension_numbers = #tpu.dot_dimension_numbers<[1], [0], [0], [1], [0, 0, 1, 1], [], []>} : vector<8x4xbf16>, vector<4x256xbf16>, vector<8x256xf32> -> vector<8x256xf32>
    %32 = arith.addf %24, %31 : vector<8x256xf32>
    %33 = vector.extract_strided_slice %1 {offsets = [0, 34], sizes = [4, 256], strides = [1, 1]} : vector<4x324xbf16> to vector<4x256xbf16>
    %34 = vector.extract_strided_slice %2 {offsets = [4, 0, 0], sizes = [1, 8, 4], strides = [1, 1, 1]} : vector<9x8x4xbf16> to vector<1x8x4xbf16>
    %35 = vector.shape_cast %34 : vector<1x8x4xbf16> to vector<8x4xbf16>
    %cst_16 = arith.constant dense<0.000000e+00> : vector<8x256xf32>
    %36 = tpu.matmul %35, %33, %cst_16 {dimension_numbers = #tpu.dot_dimension_numbers<[1], [0], [0], [1], [0, 0, 1, 1], [], []>} : vector<8x4xbf16>, vector<4x256xbf16>, vector<8x256xf32> -> vector<8x256xf32>
    %37 = arith.addf %32, %36 : vector<8x256xf32>
    %38 = vector.extract_strided_slice %1 {offsets = [0, 36], sizes = [4, 256], strides = [1, 1]} : vector<4x324xbf16> to vector<4x256xbf16>
    %c0_17 = arith.constant 0 : index
    %c0_18 = arith.constant 0 : index
    %39 = vector.load %arg6[%c0_17, %c0_18] : memref<1x256xbf16, #tpu.memory_space<vmem>>, vector<1x256xbf16>
    %40 = vector.broadcast %39 : vector<1x256xbf16> to vector<4x256xbf16>
    %41 = arith.mulf %38, %40 : vector<4x256xbf16>
    %42 = vector.extract_strided_slice %2 {offsets = [5, 0, 0], sizes = [1, 8, 4], strides = [1, 1, 1]} : vector<9x8x4xbf16> to vector<1x8x4xbf16>
    %43 = vector.shape_cast %42 : vector<1x8x4xbf16> to vector<8x4xbf16>
    %cst_19 = arith.constant dense<0.000000e+00> : vector<8x256xf32>
    %44 = tpu.matmul %43, %41, %cst_19 {dimension_numbers = #tpu.dot_dimension_numbers<[1], [0], [0], [1], [0, 0, 1, 1], [], []>} : vector<8x4xbf16>, vector<4x256xbf16>, vector<8x256xf32> -> vector<8x256xf32>
    %45 = arith.addf %37, %44 : vector<8x256xf32>
    %46 = vector.extract_strided_slice %1 {offsets = [0, 64], sizes = [4, 256], strides = [1, 1]} : vector<4x324xbf16> to vector<4x256xbf16>
    %c0_20 = arith.constant 0 : index
    %c0_21 = arith.constant 0 : index
    %47 = vector.load %arg5[%c0_20, %c0_21] : memref<1x256xbf16, #tpu.memory_space<vmem>>, vector<1x256xbf16>
    %48 = vector.broadcast %47 : vector<1x256xbf16> to vector<4x256xbf16>
    %49 = arith.mulf %46, %48 : vector<4x256xbf16>
    %50 = vector.extract_strided_slice %2 {offsets = [6, 0, 0], sizes = [1, 8, 4], strides = [1, 1, 1]} : vector<9x8x4xbf16> to vector<1x8x4xbf16>
    %51 = vector.shape_cast %50 : vector<1x8x4xbf16> to vector<8x4xbf16>
    %cst_22 = arith.constant dense<0.000000e+00> : vector<8x256xf32>
    %52 = tpu.matmul %51, %49, %cst_22 {dimension_numbers = #tpu.dot_dimension_numbers<[1], [0], [0], [1], [0, 0, 1, 1], [], []>} : vector<8x4xbf16>, vector<4x256xbf16>, vector<8x256xf32> -> vector<8x256xf32>
    %53 = arith.addf %45, %52 : vector<8x256xf32>
    %54 = vector.extract_strided_slice %1 {offsets = [0, 66], sizes = [4, 256], strides = [1, 1]} : vector<4x324xbf16> to vector<4x256xbf16>
    %55 = vector.extract_strided_slice %2 {offsets = [7, 0, 0], sizes = [1, 8, 4], strides = [1, 1, 1]} : vector<9x8x4xbf16> to vector<1x8x4xbf16>
    %56 = vector.shape_cast %55 : vector<1x8x4xbf16> to vector<8x4xbf16>
    %cst_23 = arith.constant dense<0.000000e+00> : vector<8x256xf32>
    %57 = tpu.matmul %56, %54, %cst_23 {dimension_numbers = #tpu.dot_dimension_numbers<[1], [0], [0], [1], [0, 0, 1, 1], [], []>} : vector<8x4xbf16>, vector<4x256xbf16>, vector<8x256xf32> -> vector<8x256xf32>
    %58 = arith.addf %53, %57 : vector<8x256xf32>
    %59 = vector.extract_strided_slice %1 {offsets = [0, 68], sizes = [4, 256], strides = [1, 1]} : vector<4x324xbf16> to vector<4x256xbf16>
    %c0_24 = arith.constant 0 : index
    %c0_25 = arith.constant 0 : index
    %60 = vector.load %arg6[%c0_24, %c0_25] : memref<1x256xbf16, #tpu.memory_space<vmem>>, vector<1x256xbf16>
    %61 = vector.broadcast %60 : vector<1x256xbf16> to vector<4x256xbf16>
    %62 = arith.mulf %59, %61 : vector<4x256xbf16>
    %63 = vector.extract_strided_slice %2 {offsets = [8, 0, 0], sizes = [1, 8, 4], strides = [1, 1, 1]} : vector<9x8x4xbf16> to vector<1x8x4xbf16>
    %64 = vector.shape_cast %63 : vector<1x8x4xbf16> to vector<8x4xbf16>
    %cst_26 = arith.constant dense<0.000000e+00> : vector<8x256xf32>
    %65 = tpu.matmul %64, %62, %cst_26 {dimension_numbers = #tpu.dot_dimension_numbers<[1], [0], [0], [1], [0, 0, 1, 1], [], []>} : vector<8x4xbf16>, vector<4x256xbf16>, vector<8x256xf32> -> vector<8x256xf32>
    %66 = arith.addf %58, %65 : vector<8x256xf32>
    %c0_27 = arith.constant 0 : index
    %c0_28 = arith.constant 0 : index
    %67 = vector.load %arg4[%c0_27, %c0_28] : memref<8x1xf32, #tpu.memory_space<vmem>>, vector<8x1xf32>
    %68 = vector.broadcast %67 : vector<8x1xf32> to vector<8x256xf32>
    %69 = arith.addf %66, %68 : vector<8x256xf32>
    %cst_29 = arith.constant 0.000000e+00 : f32
    %70 = vector.broadcast %cst_29 : f32 to vector<8x256xf32>
    %71 = arith.maximumf %69, %70 : vector<8x256xf32>
    %c0_30 = arith.constant 0 : index
    %c0_31 = arith.constant 0 : index
    %c0_32 = arith.constant 0 : index
    %72 = vector.load %arg7[%c0_30, %c0_31, %c0_32] : memref<1x8x256xf32, #tpu.memory_space<vmem>>, vector<1x8x256xf32>
    %73 = vector.shape_cast %72 : vector<1x8x256xf32> to vector<8x256xf32>
    %74 = vector.shape_cast %71 : vector<8x256xf32> to vector<1x8x256xf32>
    tpu.vector_store %arg7[%c0_30, %c0_31, %c0_32], %74 {strides = array<i32>} : memref<1x8x256xf32, #tpu.memory_space<vmem>>, vector<1x8x256xf32>,
    return
  }
  func.func @transform_0(%arg0: i32, %arg1: i32) -> (i32, i32, i32, i32) {
    %c0_i32 = arith.constant 0 : i32
    %c0_i32_0 = arith.constant 0 : i32
    %c0_i32_1 = arith.constant 0 : i32
    return %arg0, %arg1, %c0_i32, %c0_i32_0 : i32, i32, i32, i32
  }
  func.func @transform_1(%arg0: i32, %arg1: i32) -> (i32, i32, i32) {
    %c0_i32 = arith.constant 0 : i32
    %c0_i32_0 = arith.constant 0 : i32
    %c0_i32_1 = arith.constant 0 : i32
    %c0_i32_2 = arith.constant 0 : i32
    return %c0_i32, %c0_i32_0, %c0_i32_1 : i32, i32, i32
  }
  func.func @transform_2(%arg0: i32, %arg1: i32) -> (i32, i32) {
    %c0_i32 = arith.constant 0 : i32
    %c0_i32_0 = arith.constant 0 : i32
    %c0_i32_1 = arith.constant 0 : i32
    return %c0_i32, %c0_i32_0 : i32, i32
  }
  func.func @transform_3(%arg0: i32, %arg1: i32) -> (i32, i32) {
    %c0_i32 = arith.constant 0 : i32
    %c0_i32_0 = arith.constant 0 : i32
    %c0_i32_1 = arith.constant 0 : i32
    return %c0_i32, %c0_i32_0 : i32, i32
  }
  func.func @transform_4(%arg0: i32, %arg1: i32) -> (i32, i32) {
    %c0_i32 = arith.constant 0 : i32
    %c0_i32_0 = arith.constant 0 : i32
    %c0_i32_1 = arith.constant 0 : i32
    return %c0_i32, %c0_i32_0 : i32, i32
  }
  func.func @transform_5(%arg0: i32, %arg1: i32) -> (i32, i32, i32) {
    %c0_i32 = arith.constant 0 : i32
    %c0_i32_0 = arith.constant 0 : i32
    return %arg0, %c0_i32, %arg1 : i32, i32, i32
  }
}

</mosaic_0001>

<llo_original>
// kernel: mep_cover_pallas.1
$region0: #{mep_cover_pallas.1}
  #allocation0 [shape = 'u32[]', space=smem, size = 0x4, offset = 0x4, fixed_abs, tag = 'smem constant byte address 0x4 - core index']
  #allocation1 [shape = 'u32[144,128]{1,0:T(1,128)}', space=vmem, size = 0x12000, scoped, tag = 'internal scratch']
  %s0 = inlined_call_operand.vmem [shape: bf16[2,1,4,324], index: 0, kind: input, shape index: {}]
  %s1 = inlined_call_operand.vmem [shape: bf16[9,8,4], index: 1, kind: input, shape index: {}]
  %s2 = inlined_call_operand.vmem [shape: f32[8,1], index: 2, kind: input, shape index: {}]
  %s3 = inlined_call_operand.vmem [shape: bf16[1,256], index: 3, kind: input, shape index: {}]
  %s4 = inlined_call_operand.vmem [shape: bf16[1,256], index: 4, kind: input, shape index: {}]
  %s5 = inlined_call_operand.vmem [shape: f32[2,8,256], index: 5, kind: output, shape index: {}]
  %s6 = sld [smem:[#allocation0]]
  $region53: #{mep_cover_pallas.1} parent=0
    _
  %s8 = ssub.s32 1, %s6
  %s9 = scalar_select 0, %s8, %s6
  loop: start=0, step=1, limit=4
  $region2: #{mep_cover_pallas.1} parent=0 // loop_pre_header
    _
  $region3: #{mep_cover_pallas.1} parent=0 // loop_header
    %s11 = sphi 0, %s15
    %p12 = scmp.ge.s32.totalorder %s11, 4
    %s18 = sphi 0, %s30
    %s19 = sphi 0, %s26
    %s20 = sphi 0, %s18
    %s21 = sphi 0, %s19
    %s22 = sphi 0, %s20
    %s23 = sphi 0, %s21
    %s35 = sphi 0, %s37
    %s38 = sphi 0, %s35
    %s39 = sphi 0, %s38
    %s55 = sphi 0, %s39
    %s59 = sphi 0, %s59
    %s61 = sphi 0, %s59
    %s62 = sphi 0, %s61
    %s76 = sphi 0, %s62
    %s80 = sphi 0, %s80
    %s82 = sphi 0, %s80
    %s83 = sphi 0, %s82
    %s97 = sphi 0, %s83
    %s101 = sphi 0, %s101
    %s103 = sphi 0, %s101
    %s104 = sphi 0, %s103
    %s118 = sphi 0, %s104
    %s122 = sphi 0, %s122
    %s124 = sphi 0, %s122
    %s125 = sphi 0, %s124
    %s139 = sphi 0, %s125
    %s147 = sphi 0, %s149
    %s150 = sphi 0, %s147
    %s151 = sphi 0, %s150
    %s167 = sphi 0, %s151
  $region4: #{mep_cover_pallas.1} parent=0 // loop_header_branch
    %14 = sbr.rel (%p12) target = $region8
  $region5: #{mep_cover_pallas.1} parent=0 // loop_body
    %s16 = ssub.s32 %s11, 1
    %s17 = ssub.s32 %s11, 2
    %s24 = sadd.s32 1, %s19
    %p25 = scmp.ge.s32.totalorder %s24, 1
    %s26 = scalar_select %p25, 0, %s24
    %s27 = sadd.s32 1, %s18
    %s28 = scalar_select %p25, %s27, %s18
    %p29 = scmp.ge.s32.totalorder %s28, 2
    %s30 = scalar_select %p29, 0, %s28
    %s31 = ssub.s32 %s18, %s30
    %s32 = ssub.s32 %s19, %s26
    %s33 = sor.u32 %s31, %s32
    %p34 = scmp.eq.s32.totalorder %s33, 0
    %s36 = sadd.s32 %s35, 1
    %s37 = scalar_select %p34, %s35, %s36
    %p40 = pneg %p34
    %p41 = scmp.eq.s32.totalorder %s11, 1
    %p42 = por %p40, %p41
    %p43 = scmp.ne.s32.totalorder %s35, %s38
    %p44 = scmp.eq.s32.totalorder %s11, 0
    %p45 = por %p43, %p44
    %p46 = scmp.ne.s32.totalorder %s35, %s38
    %p47 = scmp.eq.s32.totalorder %s16, 1
    %p48 = por %p46, %p47
    %p49 = scmp.ne.s32.totalorder %s38, %s39
    %p50 = scmp.eq.s32.totalorder %s16, 0
    %p51 = por %p49, %p50
    %p52 = scmp.ne.s32.totalorder %s38, %s39
    %p53 = scmp.eq.s32.totalorder %s17, 1
    %p54 = por %p52, %p53
    %p56 = scmp.ne.s32.totalorder %s39, %s55
    %p57 = scmp.eq.s32.totalorder %s17, 0
    %p58 = por %p56, %p57
    %s60 = sadd.s32 %s59, 1
    %p63 = scmp.eq.s32.totalorder %s11, 1
    %p64 = scmp.ne.s32.totalorder %s59, %s61
    %p65 = scmp.eq.s32.totalorder %s11, 0
    %p66 = por %p64, %p65
    %p67 = scmp.ne.s32.totalorder %s59, %s61
    %p68 = scmp.eq.s32.totalorder %s16, 1
    %p69 = por %p67, %p68
    %p70 = scmp.ne.s32.totalorder %s61, %s62
    %p71 = scmp.eq.s32.totalorder %s16, 0
    %p72 = por %p70, %p71
    %p73 = scmp.ne.s32.totalorder %s61, %s62
    %p74 = scmp.eq.s32.totalorder %s17, 1
    %p75 = por %p73, %p74
    %p77 = scmp.ne.s32.totalorder %s62, %s76
    %p78 = scmp.eq.s32.totalorder %s17, 0
    %p79 = por %p77, %p78
    %s81 = sadd.s32 %s80, 1
    %p84 = scmp.eq.s32.totalorder %s11, 1
    %p85 = scmp.ne.s32.totalorder %s80, %s82
    %p86 = scmp.eq.s32.totalorder %s11, 0
    %p87 = por %p85, %p86
    %p88 = scmp.ne.s32.totalorder %s80, %s82
    %p89 = scmp.eq.s32.totalorder %s16, 1
    %p90 = por %p88, %p89
    %p91 = scmp.ne.s32.totalorder %s82, %s83
    %p92 = scmp.eq.s32.totalorder %s16, 0
    %p93 = por %p91, %p92
    %p94 = scmp.ne.s32.totalorder %s82, %s83
    %p95 = scmp.eq.s32.totalorder %s17, 1
    %p96 = por %p94, %p95
    %p98 = scmp.ne.s32.totalorder %s83, %s97
    %p99 = scmp.eq.s32.totalorder %s17, 0
    %p100 = por %p98, %p99
    %s102 = sadd.s32 %s101, 1
    %p105 = scmp.eq.s32.totalorder %s11, 1
    %p106 = scmp.ne.s32.totalorder %s101, %s103
    %p107 = scmp.eq.s32.totalorder %s11, 0
    %p108 = por %p106, %p107
    %p109 = scmp.ne.s32.totalorder %s101, %s103
    %p110 = scmp.eq.s32.totalorder %s16, 1
    %p111 = por %p109, %p110
    %p112 = scmp.ne.s32.totalorder %s103, %s104
    %p113 = scmp.eq.s32.totalorder %s16, 0
    %p114 = por %p112, %p113
    %p115 = scmp.ne.s32.totalorder %s103, %s104
    %p116 = scmp.eq.s32.totalorder %s17, 1
    %p117 = por %p115, %p116
    %p119 = scmp.ne.s32.totalorder %s104, %s118
    %p120 = scmp.eq.s32.totalorder %s17, 0
    %p121 = por %p119, %p120
    %s123 = sadd.s32 %s122, 1
    %p126 = scmp.eq.s32.totalorder %s11, 1
    %p127 = scmp.ne.s32.totalorder %s122, %s124
    %p128 = scmp.eq.s32.totalorder %s11, 0
    %p129 = por %p127, %p128
    %p130 = scmp.ne.s32.totalorder %s122, %s124
    %p131 = scmp.eq.s32.totalorder %s16, 1
    %p132 = por %p130, %p131
    %p133 = scmp.ne.s32.totalorder %s124, %s125
    %p134 = scmp.eq.s32.totalorder %s16, 0
    %p135 = por %p133, %p134
    %p136 = scmp.ne.s32.totalorder %s124, %s125
    %p137 = scmp.eq.s32.totalorder %s17, 1
    %p138 = por %p136, %p137
    %p140 = scmp.ne.s32.totalorder %s125, %s139
    %p141 = scmp.eq.s32.totalorder %s17, 0
    %p142 = por %p140, %p141
    %s143 = ssub.s32 %s18, %s30
    %s144 = ssub.s32 %s19, %s26
    %s145 = sor.u32 %s143, %s144
    %p146 = scmp.eq.s32.totalorder %s145, 0
    %s148 = sadd.s32 %s147, 1
    %s149 = scalar_select %p146, %s147, %s148
    %p152 = pneg %p146
    %p153 = scmp.eq.s32.totalorder %s11, 1
    %p154 = por %p152, %p153
    %p155 = scmp.ne.s32.totalorder %s147, %s150
    %p156 = scmp.eq.s32.totalorder %s11, 0
    %p157 = por %p155, %p156
    %p158 = scmp.ne.s32.totalorder %s147, %s150
    %p159 = scmp.eq.s32.totalorder %s16, 1
    %p160 = por %p158, %p159
    %p161 = scmp.ne.s32.totalorder %s150, %s151
    %p162 = scmp.eq.s32.totalorder %s16, 0
    %p163 = por %p161, %p162
    %p164 = scmp.ne.s32.totalorder %s150, %s151
    %p165 = scmp.eq.s32.totalorder %s17, 1
    %p166 = por %p164, %p165
    %p168 = scmp.ne.s32.totalorder %s151, %s167
    %p169 = scmp.eq.s32.totalorder %s17, 0
    %p170 = por %p168, %p169
    %p171 = scmp.le.s32.totalorder 1, %s11
    %p172 = scmp.lt.s32.totalorder %s11, 3
    %p173 = pnand %p171, %p172
    %p174 = pneg %p173
    // Predicated region
    $region9: #{mep_cover_pallas.1} parent=5 // pred_check
      _
    $region10: #{mep_cover_pallas.1} parent=5 // pred_check_branch
      %176 = sbr.rel (%p173) target = $region12
    $region11: #{mep_cover_pallas.1} parent=5 // pred_region
      %s177 = ssub.s32 %s11, 1
      // Predicated region
      $region13: #{mep_cover_pallas.1} parent=11 // pred_check
        %p178 = pneg %p72
      $region14: #{mep_cover_pallas.1} parent=11 // pred_check_branch
        %180 = sbr.rel (%p178) target = $region16
      $region15: #{mep_cover_pallas.1} parent=11 // pred_region
        _
      $region16: #{mep_cover_pallas.1} parent=11 // pred_fallthru
        _
      // Predicated region
      $region17: #{mep_cover_pallas.1} parent=11 // pred_check
        %p181 = pneg %p93
      $region18: #{mep_cover_pallas.1} parent=11 // pred_check_branch
        %183 = sbr.rel (%p181) target = $region20
      $region19: #{mep_cover_pallas.1} parent=11 // pred_region
        _
      $region20: #{mep_cover_pallas.1} parent=11 // pred_fallthru
        _
      // Predicated region
      $region21: #{mep_cover_pallas.1} parent=11 // pred_check
        %p184 = pneg %p114
      $region22: #{mep_cover_pallas.1} parent=11 // pred_check_branch
        %186 = sbr.rel (%p184) target = $region24
      $region23: #{mep_cover_pallas.1} parent=11 // pred_region
        _
      $region24: #{mep_cover_pallas.1} parent=11 // pred_fallthru
        _
      // Predicated region
      $region25: #{mep_cover_pallas.1} parent=11 // pred_check
        %p187 = pneg %p135
      $region26: #{mep_cover_pallas.1} parent=11 // pred_check_branch
        %189 = sbr.rel (%p187) target = $region28
      $region27: #{mep_cover_pallas.1} parent=11 // pred_region
        _
      $region28: #{mep_cover_pallas.1} parent=11 // pred_fallthru
        _
    $region12: #{mep_cover_pallas.1} parent=5 // pred_fallthru
      _
    %p190 = scmp.lt.s32.totalorder %s11, 2
    // Predicated region
    $region29: #{mep_cover_pallas.1} parent=5 // pred_check
      %p191 = pneg %p190
    $region30: #{mep_cover_pallas.1} parent=5 // pred_check_branch
      %193 = sbr.rel (%p191) target = $region32
    $region31: #{mep_cover_pallas.1} parent=5 // pred_region
      // Predicated region
      $region33: #{mep_cover_pallas.1} parent=31 // pred_check
        %p194 = pneg %p45
      $region34: #{mep_cover_pallas.1} parent=31 // pred_check_branch
        %196 = sbr.rel (%p194) target = $region36
      $region35: #{mep_cover_pallas.1} parent=31 // pred_region
        %p197 = scmp.lt.s32.totalorder %s18, 1
        %s198 = scalar_select %p197, %s18, 1
        %p199 = scmp.lt.s32.totalorder %s19, 0
        %s200 = scalar_select %p199, %s19, 0
        %s201 = smul.addr %s200, 3
        %s202 = smul.addr %s198, 3
        %s203 = sadd.s32 %s201, %s202
        %s204 = smul.addr %s203, 2
        %s205 = scalar_lea.vmem %s0, %s204
      $region36: #{mep_cover_pallas.1} parent=31 // pred_fallthru
        _
    $region32: #{mep_cover_pallas.1} parent=5 // pred_fallthru
      _
    %p206 = scmp.le.s32.totalorder 1, %s11
    %p207 = scmp.lt.s32.totalorder %s11, 3
    %p208 = pnand %p206, %p207
    %p209 = pneg %p208
    // Predicated region
    $region37: #{mep_cover_pallas.1} parent=5 // pred_check
      _
    $region38: #{mep_cover_pallas.1} parent=5 // pred_check_branch
      %211 = sbr.rel (%p208) target = $region40
    $region39: #{mep_cover_pallas.1} parent=5 // pred_region
      %s212 = ssub.s32 %s11, 1
      %p213 = scmp.lt.s32.totalorder %s20, 1
      %s214 = scalar_select %p213, %s20, 1
      %p215 = scmp.lt.s32.totalorder %s21, 0
      %s216 = scalar_select %p215, %s21, 0
      %s217 = smul.addr %s216, 3
      %s218 = smul.addr %s214, 3
      %s219 = sadd.s32 %s217, %s218
      %s220 = smul.addr %s219, 2
      %s221 = scalar_lea.vmem %s0, %s220
      %p222 = pneg %p51
      %p223 = pneg %p48
      %p224 = pneg %p72
      %p225 = pneg %p69
      %p226 = pneg %p93
      %p227 = pneg %p90
      %p228 = pneg %p114
      %p229 = pneg %p111
      %p230 = pneg %p135
      %p231 = pneg %p132
      %p232 = pneg %p163
      %p233 = pneg %p160
      %s234 = smul.u32 2, %s21
      %p235 = scmp.lt.s32.totalorder %s20, 1
      %s236 = scalar_select %p235, %s20, 1
      %p237 = scmp.lt.s32.totalorder %s234, 1
      %s238 = scalar_select %p237, %s234, 1
      %s239 = smul.addr %s236, 2
      %s240 = sadd.s32 %s238, %s239
      %s241 = smul.addr %s240, 8
      %s242 = scalar_lea.vmem %s5, %s241
      %p243 = scmp.lt.s32.totalorder %s20, 1
      %s244 = scalar_select %p243, %s20, 1
      %p245 = scmp.lt.s32.totalorder %s21, 0
      %s246 = scalar_select %p245, %s21, 0
      %s247 = smul.addr %s246, 3
      %s248 = smul.addr %s244, 3
      %s249 = sadd.s32 %s247, %s248
      %s250 = smul.addr %s249, 2
      %s251 = scalar_lea.vmem %s0, %s250
      %s252 = smul.u32 2, %s21
      %p253 = scmp.lt.s32.totalorder %s20, 1
      %s254 = scalar_select %p253, %s20, 1
      %p255 = scmp.lt.s32.totalorder %s252, 1
      %s256 = scalar_select %p255, %s252, 1
      %s257 = smul.addr %s254, 2
      %s258 = sadd.s32 %s256, %s257
      %s259 = smul.addr %s258, 8
      %s260 = scalar_lea.vmem %s5, %s259
      %s261 = smul.u32 2, %s21
      %v263 = vld [vmem:[%s251] sm:$0x3f]
      %v264 = vld [vmem:[%s1] sm:$0xf]
      %v265 = vld [vmem:[%s1 + $0x4] sm:$0xf]
      %v266 = vld [vmem:[%s1 + $0x8] sm:$0xf]
      %v267 = vld [vmem:[%s1 + $0xc] sm:$0xf]
      %v268 = vld [vmem:[%s1 + $0x10] sm:$0xf]
      %v269 = vld [vmem:[%s1 + $0x14] sm:$0xf]
      %v270 = vld [vmem:[%s1 + $0x18] sm:$0xf]
      %v271 = vld [vmem:[%s1 + $0x1c] sm:$0xf]
      %v272 = vld [vmem:[%s1 + $0x20] sm:$0xf]
      %v273 = vld [vmem:[%s3] sm:$0x3]
      %v276 = vunpack.c.l.s4 1966171168
      %v277 = vunpack.c.0.s8 %v276
      %v278 = vlaneseq
      %v279 = vshrl.u32 %v278, 7
      %v280 = vsub.s32 %v277, %v279
      %v281 = vrot.slane %v273, %v280
      %v282 = vcombine.high %v281, %v281
      %v284 = vunpack.c.l.s4 1966171168
      %v285 = vunpack.c.0.s8 %v284
      %v286 = vlaneseq
      %v287 = vshrl.u32 %v286, 7
      %v288 = vsub.s32 %v285, %v287
      %v289 = vrot.slane %v281, %v288
      %v291 = vunpack.c.l.s4 1966171168
      %v292 = vunpack.c.0.s8 %v291
      %v293 = vlaneseq
      %v294 = vshrl.u32 %v293, 7
      %v295 = vsub.s32 %v292, %v294
      %v296 = vrot.slane %v282, %v295
      %v298 = vpack.i.b16 %v289, %v289
      %v300 = vlaneseq
      %v301 = vshrl.u32 %v300, 7
      %v302 = vsub.s32 0, %v301
      %v303 = vrot.slane %v298, %v302
      %v305 = vpack.i.b16 %v296, %v296
      %v307 = vlaneseq
      %v308 = vshrl.u32 %v307, 7
      %v309 = vsub.s32 0, %v308
      %v310 = vrot.slane %v305, %v309
      %v313 = vcombine.low %v303, %v310
      %v315 = vunpack.c.l.s4 1983009808
      %v316 = vunpack.c.0.s8 %v315
      %v317 = vlaneseq
      %v318 = vshrl.u32 %v317, 7
      %v319 = vsub.s32 %v316, %v318
      %v320 = vrot.slane %v313, %v319
      %v322 = vmul.bf16 %v263, %v320
      %v324 = vcombine.high %v263, %v263
      %v326 = vunpack.c.l.s4 1983009808
      %v327 = vunpack.c.0.s8 %v326
      %v328 = vlaneseq
      %v329 = vshrl.u32 %v328, 7
      %v330 = vsub.s32 %v327, %v329
      %v331 = vrot.slane %v263, %v330
      %v333 = vunpack.c.l.s4 1983009808
      %v334 = vunpack.c.0.s8 %v333
      %v335 = vlaneseq
      %v336 = vshrl.u32 %v335, 7
      %v337 = vsub.s32 %v334, %v336
      %v338 = vrot.slane %v324, %v337
      %v339 = vcombine.high %v331, %v331
      %340 = vrot.lane.b32.xlu0 %v331, 126
      %v341 = vpop.permute.xlu0 %340
      %342 = vrot.lane.b32.xlu0 %v339, 126
      %v343 = vpop.permute.xlu0 %342
      %344 = vrot.lane.b32.xlu0 %v338, 126
      %v345 = vpop.permute.xlu0 %344
      %vm346 = vcmask 1031168
      %v347 = vsel %vm346, %v341, %v343
      %v348 = vsel %vm346, %v343, %v345
      %vm349 = vcmask 31744
      %v351 = vsel %vm349, %v265, 0
      %vm353 = vcmask 1041408
      %v355 = vsel %vm353, %v347, 0
      %v358 = vsel %vm353, %v348, 0
      %360 = vmatprep.subr.bf16.mxu0 %v358
      %361 = vmatpush1.bf16.msra.mxu0 %v355
      %362 = vmatprep.subr.bf16.mxu0 0
      %363 = vmatpush1.bf16.msra.mxu0 0
      %364 = vmatprep.subr.bf16.mxu0 0
      %365 = vmatpush1.bf16.msra.mxu0 0
      %366 = vmatprep.subr.bf16.mxu0 0
      %367 = vmatpush1.bf16.msra.mxu0 0
      %368 = vmatprep.subr.bf16.mxu0 0
      %369 = vmatpush1.bf16.msra.mxu0 0
      %370 = vmatprep.subr.bf16.mxu0 0
      %371 = vmatpush1.bf16.msra.mxu0 0
      %372 = vmatprep.subr.bf16.mxu0 0
      %373 = vmatpush1.bf16.msra.mxu0 0
      %374 = vmatprep.subr.bf16.mxu0 0
      %375 = vmatpush1.bf16.msra.mxu0 0
      %376 = vmatprep.subr.bf16.mxu0 0
      %377 = vmatpush1.bf16.msra.mxu0 0
      %378 = vmatprep.subr.bf16.mxu0 0
      %379 = vmatpush1.bf16.msra.mxu0 0
      %380 = vmatprep.subr.bf16.mxu0 0
      %381 = vmatpush1.bf16.msra.mxu0 0
      %382 = vmatprep.subr.bf16.mxu0 0
      %383 = vmatpush1.bf16.msra.mxu0 0
      %384 = vmatprep.subr.bf16.mxu0 0
      %385 = vmatpush1.bf16.msra.mxu0 0
      %386 = vmatprep.subr.bf16.mxu0 0
      %387 = vmatpush1.bf16.msra.mxu0 0
      %388 = vmatprep.subr.bf16.mxu0 0
      %389 = vmatpush1.bf16.msra.mxu0 0
      %390 = vmatprep.subr.bf16.mxu0 0
      %391 = vmatpush1.bf16.msra.mxu0 0
      %392 = vmatprep.mubr.bf16.mxu0 0
      %393 = vmatmul.mubr.bf16.gmra.mrb[0].mxu0 %v351
      %v394 = vpop.f32.mrb[0].mxu0
      %v395 = vadd.f32 0.0, %v394
      %v396 = vpop.f32.mrb[0].mxu0
      %v397 = vadd.f32 0.0, %v396
      %v398 = vpop.f32.mrb[0].mxu0
      %v399 = vpop.f32.mrb[0].mxu0
      %400 = vdwg.mxu0
      %v403 = vunpack.c.l.s4 1983009808
      %v404 = vunpack.c.0.s8 %v403
      %v405 = vlaneseq
      %v406 = vshrl.u32 %v405, 7
      %v407 = vsub.s32 %v404, %v406
      %v408 = vrot.slane %v322, %v407
      %v409 = vcombine.high %v408, %v408
      %v411 = vsel %vm349, %v264, 0
      %v414 = vsel %vm353, %v408, 0
      %v417 = vsel %vm353, %v409, 0
      %419 = vmatprep.subr.bf16.mxu0 %v417
      %420 = vmatpush1.bf16.msra.mxu0 %v414
      %421 = vmatprep.subr.bf16.mxu0 0
      %422 = vmatpush1.bf16.msra.mxu0 0
      %423 = vmatprep.subr.bf16.mxu0 0
      %424 = vmatpush1.bf16.msra.mxu0 0
      %425 = vmatprep.subr.bf16.mxu0 0
      %426 = vmatpush1.bf16.msra.mxu0 0
      %427 = vmatprep.subr.bf16.mxu0 0
      %428 = vmatpush1.bf16.msra.mxu0 0
      %429 = vmatprep.subr.bf16.mxu0 0
      %430 = vmatpush1.bf16.msra.mxu0 0
      %431 = vmatprep.subr.bf16.mxu0 0
      %432 = vmatpush1.bf16.msra.mxu0 0
      %433 = vmatprep.subr.bf16.mxu0 0
      %434 = vmatpush1.bf16.msra.mxu0 0
      %435 = vmatprep.subr.bf16.mxu0 0
      %436 = vmatpush1.bf16.msra.mxu0 0
      %437 = vmatprep.subr.bf16.mxu0 0
      %438 = vmatpush1.bf16.msra.mxu0 0
      %439 = vmatprep.subr.bf16.mxu0 0
      %440 = vmatpush1.bf16.msra.mxu0 0
      %441 = vmatprep.subr.bf16.mxu0 0
      %442 = vmatpush1.bf16.msra.mxu0 0
      %443 = vmatprep.subr.bf16.mxu0 0
      %444 = vmatpush1.bf16.msra.mxu0 0
      %445 = vmatprep.subr.bf16.mxu0 0
      %446 = vmatpush1.bf16.msra.mxu0 0
      %447 = vmatprep.subr.bf16.mxu0 0
      %448 = vmatpush1.bf16.msra.mxu0 0
      %449 = vmatprep.subr.bf16.mxu0 0
      %450 = vmatpush1.bf16.msra.mxu0 0
      %451 = vmatprep.mubr.bf16.mxu0 0
      %452 = vmatmul.mubr.bf16.gmra.mrb[0].mxu0 %v411
      %v453 = vpop.f32.mrb[0].mxu0
      %v454 = vadd.f32 %v395, %v453
      %v455 = vpop.f32.mrb[0].mxu0
      %v456 = vadd.f32 %v397, %v455
      %v457 = vpop.f32.mrb[0].mxu0
      %v458 = vpop.f32.mrb[0].mxu0
      %459 = vdwg.mxu0
      %v460 = vld [vmem:[%s4] sm:$0x3]
      %v463 = vunpack.c.l.s4 1966171168
      %v464 = vunpack.c.0.s8 %v463
      %v465 = vlaneseq
      %v466 = vshrl.u32 %v465, 7
      %v467 = vsub.s32 %v464, %v466
      %v468 = vrot.slane %v460, %v467
      %v469 = vcombine.high %v468, %v468
      %v471 = vunpack.c.l.s4 1966171168
      %v472 = vunpack.c.0.s8 %v471
      %v473 = vlaneseq
      %v474 = vshrl.u32 %v473, 7
      %v475 = vsub.s32 %v472, %v474
      %v476 = vrot.slane %v468, %v475
      %v478 = vunpack.c.l.s4 1966171168
      %v479 = vunpack.c.0.s8 %v478
      %v480 = vlaneseq
      %v481 = vshrl.u32 %v480, 7
      %v482 = vsub.s32 %v479, %v481
      %v483 = vrot.slane %v469, %v482
      %v485 = vpack.i.b16 %v476, %v476
      %v487 = vlaneseq
      %v488 = vshrl.u32 %v487, 7
      %v489 = vsub.s32 0, %v488
      %v490 = vrot.slane %v485, %v489
      %v492 = vpack.i.b16 %v483, %v483
      %v494 = vlaneseq
      %v495 = vshrl.u32 %v494, 7
      %v496 = vsub.s32 0, %v495
      %v497 = vrot.slane %v492, %v496
      %v500 = vcombine.low %v490, %v497
      %v502 = vunpack.c.l.s4 1983009808
      %v503 = vunpack.c.0.s8 %v502
      %v504 = vlaneseq
      %v505 = vshrl.u32 %v504, 7
      %v506 = vsub.s32 %v503, %v505
      %v507 = vrot.slane %v500, %v506
      %508 = vrot.lane.b32.xlu0 %v507, 4
      %v509 = vpop.permute.xlu0 %508
      %v510 = vrot.slane %v509, 6
      %vm511 = vcmask 31744
      %v512 = vsel %vm511, %v510, %v509
      %v514 = vmul.bf16 %v263, %v512
      %v516 = vcombine.high %v514, %v514
      %v518 = vunpack.c.l.s4 1983009808
      %v519 = vunpack.c.0.s8 %v518
      %v520 = vlaneseq
      %v521 = vshrl.u32 %v520, 7
      %v522 = vsub.s32 %v519, %v521
      %v523 = vrot.slane %v514, %v522
      %v525 = vunpack.c.l.s4 1983009808
      %v526 = vunpack.c.0.s8 %v525
      %v527 = vlaneseq
      %v528 = vshrl.u32 %v527, 7
      %v529 = vsub.s32 %v526, %v528
      %v530 = vrot.slane %v516, %v529
      %v531 = vcombine.high %v523, %v523
      %532 = vrot.lane.b32.xlu0 %v523, 124
      %v533 = vpop.permute.xlu0 %532
      %534 = vrot.lane.b32.xlu0 %v531, 124
      %v535 = vpop.permute.xlu0 %534
      %536 = vrot.lane.b32.xlu0 %v530, 124
      %v537 = vpop.permute.xlu0 %536
      %vm538 = vcmask 1014784
      %v539 = vsel %vm538, %v533, %v535
      %v540 = vsel %vm538, %v535, %v537
      %v542 = vsel %vm349, %v266, 0
      %v545 = vsel %vm353, %v539, 0
      %v548 = vsel %vm353, %v540, 0
      %550 = vmatprep.subr.bf16.mxu0 %v548
      %551 = vmatpush1.bf16.msra.mxu0 %v545
      %552 = vmatprep.subr.bf16.mxu0 0
      %553 = vmatpush1.bf16.msra.mxu0 0
      %554 = vmatprep.subr.bf16.mxu0 0
      %555 = vmatpush1.bf16.msra.mxu0 0
      %556 = vmatprep.subr.bf16.mxu0 0
      %557 = vmatpush1.bf16.msra.mxu0 0
      %558 = vmatprep.subr.bf16.mxu0 0
      %559 = vmatpush1.bf16.msra.mxu0 0
      %560 = vmatprep.subr.bf16.mxu0 0
      %561 = vmatpush1.bf16.msra.mxu0 0
      %562 = vmatprep.subr.bf16.mxu0 0
      %563 = vmatpush1.bf16.msra.mxu0 0
      %564 = vmatprep.subr.bf16.mxu0 0
      %565 = vmatpush1.bf16.msra.mxu0 0
      %566 = vmatprep.subr.bf16.mxu0 0
      %567 = vmatpush1.bf16.msra.mxu0 0
      %568 = vmatprep.subr.bf16.mxu0 0
      %569 = vmatpush1.bf16.msra.mxu0 0
      %570 = vmatprep.subr.bf16.mxu0 0
      %571 = vmatpush1.bf16.msra.mxu0 0
      %572 = vmatprep.subr.bf16.mxu0 0
      %573 = vmatpush1.bf16.msra.mxu0 0
      %574 = vmatprep.subr.bf16.mxu0 0
      %575 = vmatpush1.bf16.msra.mxu0 0
      %576 = vmatprep.subr.bf16.mxu0 0
      %577 = vmatpush1.bf16.msra.mxu0 0
      %578 = vmatprep.subr.bf16.mxu0 0
      %579 = vmatpush1.bf16.msra.mxu0 0
      %580 = vmatprep.subr.bf16.mxu0 0
      %581 = vmatpush1.bf16.msra.mxu0 0
      %582 = vmatprep.mubr.bf16.mxu0 0
      %583 = vmatmul.mubr.bf16.gmra.mrb[0].mxu0 %v542
      %v584 = vpop.f32.mrb[0].mxu0
      %v585 = vadd.f32 0.0, %v584
      %v586 = vpop.f32.mrb[0].mxu0
      %v587 = vadd.f32 0.0, %v586
      %v588 = vpop.f32.mrb[0].mxu0
      %v589 = vpop.f32.mrb[0].mxu0
      %590 = vdwg.mxu0
      %v591 = vadd.f32 %v454, %v585
      %v592 = vadd.f32 %v456, %v587
      %593 = vrot.lane.b32.xlu0 %v320, 32
      %v594 = vpop.permute.xlu0 %593
      %v595 = vrot.slane %v594, 6
      %vm596 = vcmask 261120
      %v597 = vsel %vm596, %v595, %v594
      %v599 = vmul.bf16 %v263, %v597
      %v601 = vcombine.high %v599, %v599
      %v603 = vunpack.c.l.s4 1983009808
      %v604 = vunpack.c.0.s8 %v603
      %v605 = vlaneseq
      %v606 = vshrl.u32 %v605, 7
      %v607 = vsub.s32 %v604, %v606
      %v608 = vrot.slane %v599, %v607
      %v610 = vunpack.c.l.s4 1983009808
      %v611 = vunpack.c.0.s8 %v610
      %v612 = vlaneseq
      %v613 = vshrl.u32 %v612, 7
      %v614 = vsub.s32 %v611, %v613
      %v615 = vrot.slane %v601, %v614
      %v616 = vcombine.high %v608, %v608
      %617 = vrot.lane.b32.xlu0 %v608, 96
      %v618 = vpop.permute.xlu0 %617
      %619 = vrot.lane.b32.xlu0 %v616, 96
      %v620 = vpop.permute.xlu0 %619
      %621 = vrot.lane.b32.xlu0 %v615, 96
      %v622 = vpop.permute.xlu0 %621
      %vm623 = vcmask 785408
      %v624 = vsel %vm623, %v618, %v620
      %v625 = vsel %vm623, %v620, %v622
      %v627 = vsel %vm349, %v267, 0
      %v630 = vsel %vm353, %v624, 0
      %v633 = vsel %vm353, %v625, 0
      %635 = vmatprep.subr.bf16.mxu0 %v633
      %636 = vmatpush1.bf16.msra.mxu0 %v630
      %637 = vmatprep.subr.bf16.mxu0 0
      %638 = vmatpush1.bf16.msra.mxu0 0
      %639 = vmatprep.subr.bf16.mxu0 0
      %640 = vmatpush1.bf16.msra.mxu0 0
      %641 = vmatprep.subr.bf16.mxu0 0
      %642 = vmatpush1.bf16.msra.mxu0 0
      %643 = vmatprep.subr.bf16.mxu0 0
      %644 = vmatpush1.bf16.msra.mxu0 0
      %645 = vmatprep.subr.bf16.mxu0 0
      %646 = vmatpush1.bf16.msra.mxu0 0
      %647 = vmatprep.subr.bf16.mxu0 0
      %648 = vmatpush1.bf16.msra.mxu0 0
      %649 = vmatprep.subr.bf16.mxu0 0
      %650 = vmatpush1.bf16.msra.mxu0 0
      %651 = vmatprep.subr.bf16.mxu0 0
      %652 = vmatpush1.bf16.msra.mxu0 0
      %653 = vmatprep.subr.bf16.mxu0 0
      %654 = vmatpush1.bf16.msra.mxu0 0
      %655 = vmatprep.subr.bf16.mxu0 0
      %656 = vmatpush1.bf16.msra.mxu0 0
      %657 = vmatprep.subr.bf16.mxu0 0
      %658 = vmatpush1.bf16.msra.mxu0 0
      %659 = vmatprep.subr.bf16.mxu0 0
      %660 = vmatpush1.bf16.msra.mxu0 0
      %661 = vmatprep.subr.bf16.mxu0 0
      %662 = vmatpush1.bf16.msra.mxu0 0
      %663 = vmatprep.subr.bf16.mxu0 0
      %664 = vmatpush1.bf16.msra.mxu0 0
      %665 = vmatprep.subr.bf16.mxu0 0
      %666 = vmatpush1.bf16.msra.mxu0 0
      %667 = vmatprep.mubr.bf16.mxu0 0
      %668 = vmatmul.mubr.bf16.gmra.mrb[0].mxu0 %v627
      %v669 = vpop.f32.mrb[0].mxu0
      %v670 = vadd.f32 0.0, %v669
      %v671 = vpop.f32.mrb[0].mxu0
      %v672 = vadd.f32 0.0, %v671
      %v673 = vpop.f32.mrb[0].mxu0
      %v674 = vpop.f32.mrb[0].mxu0
      %675 = vdwg.mxu0
      %v676 = vadd.f32 %v591, %v670
      %v677 = vadd.f32 %v592, %v672
      %678 = vrot.lane.b32.xlu0 %v331, 94
      %v679 = vpop.permute.xlu0 %678
      %680 = vrot.lane.b32.xlu0 %v339, 94
      %v681 = vpop.permute.xlu0 %680
      %682 = vrot.lane.b32.xlu0 %v338, 94
      %v683 = vpop.permute.xlu0 %682
      %vm684 = vcmask 769024
      %v685 = vsel %vm684, %v679, %v681
      %v686 = vsel %vm684, %v681, %v683
      %v688 = vsel %vm349, %v268, 0
      %v691 = vsel %vm353, %v685, 0
      %v694 = vsel %vm353, %v686, 0
      %696 = vmatprep.subr.bf16.mxu0 %v694
      %697 = vmatpush1.bf16.msra.mxu0 %v691
      %698 = vmatprep.subr.bf16.mxu0 0
      %699 = vmatpush1.bf16.msra.mxu0 0
      %700 = vmatprep.subr.bf16.mxu0 0
      %701 = vmatpush1.bf16.msra.mxu0 0
      %702 = vmatprep.subr.bf16.mxu0 0
      %703 = vmatpush1.bf16.msra.mxu0 0
      %704 = vmatprep.subr.bf16.mxu0 0
      %705 = vmatpush1.bf16.msra.mxu0 0
      %706 = vmatprep.subr.bf16.mxu0 0
      %707 = vmatpush1.bf16.msra.mxu0 0
      %708 = vmatprep.subr.bf16.mxu0 0
      %709 = vmatpush1.bf16.msra.mxu0 0
      %710 = vmatprep.subr.bf16.mxu0 0
      %711 = vmatpush1.bf16.msra.mxu0 0
      %712 = vmatprep.subr.bf16.mxu0 0
      %713 = vmatpush1.bf16.msra.mxu0 0
      %714 = vmatprep.subr.bf16.mxu0 0
      %715 = vmatpush1.bf16.msra.mxu0 0
      %716 = vmatprep.subr.bf16.mxu0 0
      %717 = vmatpush1.bf16.msra.mxu0 0
      %718 = vmatprep.subr.bf16.mxu0 0
      %719 = vmatpush1.bf16.msra.mxu0 0
      %720 = vmatprep.subr.bf16.mxu0 0
      %721 = vmatpush1.bf16.msra.mxu0 0
      %722 = vmatprep.subr.bf16.mxu0 0
      %723 = vmatpush1.bf16.msra.mxu0 0
      %724 = vmatprep.subr.bf16.mxu0 0
      %725 = vmatpush1.bf16.msra.mxu0 0
      %726 = vmatprep.subr.bf16.mxu0 0
      %727 = vmatpush1.bf16.msra.mxu0 0
      %728 = vmatprep.mubr.bf16.mxu0 0
      %729 = vmatmul.mubr.bf16.gmra.mrb[0].mxu0 %v688
      %v730 = vpop.f32.mrb[0].mxu0
      %v731 = vadd.f32 0.0, %v730
      %v732 = vpop.f32.mrb[0].mxu0
      %v733 = vadd.f32 0.0, %v732
      %v734 = vpop.f32.mrb[0].mxu0
      %v735 = vpop.f32.mrb[0].mxu0
      %736 = vdwg.mxu0
      %v737 = vadd.f32 %v676, %v731
      %v738 = vadd.f32 %v677, %v733
      %739 = vrot.lane.b32.xlu0 %v507, 36
      %v740 = vpop.permute.xlu0 %739
      %v741 = vrot.slane %v740, 6
      %vm742 = vcmask 293888
      %v743 = vsel %vm742, %v741, %v740
      %v745 = vmul.bf16 %v263, %v743
      %v747 = vcombine.high %v745, %v745
      %v749 = vunpack.c.l.s4 1983009808
      %v750 = vunpack.c.0.s8 %v749
      %v751 = vlaneseq
      %v752 = vshrl.u32 %v751, 7
      %v753 = vsub.s32 %v750, %v752
      %v754 = vrot.slane %v745, %v753
      %v756 = vunpack.c.l.s4 1983009808
      %v757 = vunpack.c.0.s8 %v756
      %v758 = vlaneseq
      %v759 = vshrl.u32 %v758, 7
      %v760 = vsub.s32 %v757, %v759
      %v761 = vrot.slane %v747, %v760
      %v762 = vcombine.high %v754, %v754
      %763 = vrot.lane.b32.xlu0 %v754, 92
      %v764 = vpop.permute.xlu0 %763
      %765 = vrot.lane.b32.xlu0 %v762, 92
      %v766 = vpop.permute.xlu0 %765
      %767 = vrot.lane.b32.xlu0 %v761, 92
      %v768 = vpop.permute.xlu0 %767
      %vm769 = vcmask 752640
      %v770 = vsel %vm769, %v764, %v766
      %v771 = vsel %vm769, %v766, %v768
      %v773 = vsel %vm349, %v269, 0
      %v776 = vsel %vm353, %v770, 0
      %v779 = vsel %vm353, %v771, 0
      %781 = vmatprep.subr.bf16.mxu0 %v779
      %782 = vmatpush1.bf16.msra.mxu0 %v776
      %783 = vmatprep.subr.bf16.mxu0 0
      %784 = vmatpush1.bf16.msra.mxu0 0
      %785 = vmatprep.subr.bf16.mxu0 0
      %786 = vmatpush1.bf16.msra.mxu0 0
      %787 = vmatprep.subr.bf16.mxu0 0
      %788 = vmatpush1.bf16.msra.mxu0 0
      %789 = vmatprep.subr.bf16.mxu0 0
      %790 = vmatpush1.bf16.msra.mxu0 0
      %791 = vmatprep.subr.bf16.mxu0 0
      %792 = vmatpush1.bf16.msra.mxu0 0
      %793 = vmatprep.subr.bf16.mxu0 0
      %794 = vmatpush1.bf16.msra.mxu0 0
      %795 = vmatprep.subr.bf16.mxu0 0
      %796 = vmatpush1.bf16.msra.mxu0 0
      %797 = vmatprep.subr.bf16.mxu0 0
      %798 = vmatpush1.bf16.msra.mxu0 0
      %799 = vmatprep.subr.bf16.mxu0 0
      %800 = vmatpush1.bf16.msra.mxu0 0
      %801 = vmatprep.subr.bf16.mxu0 0
      %802 = vmatpush1.bf16.msra.mxu0 0
      %803 = vmatprep.subr.bf16.mxu0 0
      %804 = vmatpush1.bf16.msra.mxu0 0
      %805 = vmatprep.subr.bf16.mxu0 0
      %806 = vmatpush1.bf16.msra.mxu0 0
      %807 = vmatprep.subr.bf16.mxu0 0
      %808 = vmatpush1.bf16.msra.mxu0 0
      %809 = vmatprep.subr.bf16.mxu0 0
      %810 = vmatpush1.bf16.msra.mxu0 0
      %811 = vmatprep.subr.bf16.mxu0 0
      %812 = vmatpush1.bf16.msra.mxu0 0
      %813 = vmatprep.mubr.bf16.mxu0 0
      %814 = vmatmul.mubr.bf16.gmra.mrb[0].mxu0 %v773
      %v815 = vpop.f32.mrb[0].mxu0
      %v816 = vadd.f32 0.0, %v815
      %v817 = vpop.f32.mrb[0].mxu0
      %v818 = vadd.f32 0.0, %v817
      %v819 = vpop.f32.mrb[0].mxu0
      %v820 = vpop.f32.mrb[0].mxu0
      %821 = vdwg.mxu0
      %v822 = vadd.f32 %v737, %v816
      %v823 = vadd.f32 %v738, %v818
      %824 = vrot.lane.b32.xlu0 %v320, 64
      %v825 = vpop.permute.xlu0 %824
      %v826 = vrot.slane %v825, 6
      %vm827 = vcmask 523264
      %v828 = vsel %vm827, %v826, %v825
      %v830 = vmul.bf16 %v263, %v828
      %v832 = vcombine.high %v830, %v830
      %v834 = vunpack.c.l.s4 1983009808
      %v835 = vunpack.c.0.s8 %v834
      %v836 = vlaneseq
      %v837 = vshrl.u32 %v836, 7
      %v838 = vsub.s32 %v835, %v837
      %v839 = vrot.slane %v830, %v838
      %v841 = vunpack.c.l.s4 1983009808
      %v842 = vunpack.c.0.s8 %v841
      %v843 = vlaneseq
      %v844 = vshrl.u32 %v843, 7
      %v845 = vsub.s32 %v842, %v844
      %v846 = vrot.slane %v832, %v845
      %v847 = vcombine.high %v839, %v839
      %848 = vrot.lane.b32.xlu0 %v839, 64
      %v849 = vpop.permute.xlu0 %848
      %850 = vrot.lane.b32.xlu0 %v847, 64
      %v851 = vpop.permute.xlu0 %850
      %852 = vrot.lane.b32.xlu0 %v846, 64
      %v853 = vpop.permute.xlu0 %852
      %v854 = vsel %vm827, %v849, %v851
      %v855 = vsel %vm827, %v851, %v853
      %v857 = vsel %vm349, %v270, 0
      %v860 = vsel %vm353, %v854, 0
      %v863 = vsel %vm353, %v855, 0
      %865 = vmatprep.subr.bf16.mxu0 %v863
      %866 = vmatpush1.bf16.msra.mxu0 %v860
      %867 = vmatprep.subr.bf16.mxu0 0
      %868 = vmatpush1.bf16.msra.mxu0 0
      %869 = vmatprep.subr.bf16.mxu0 0
      %870 = vmatpush1.bf16.msra.mxu0 0
      %871 = vmatprep.subr.bf16.mxu0 0
      %872 = vmatpush1.bf16.msra.mxu0 0
      %873 = vmatprep.subr.bf16.mxu0 0
      %874 = vmatpush1.bf16.msra.mxu0 0
      %875 = vmatprep.subr.bf16.mxu0 0
      %876 = vmatpush1.bf16.msra.mxu0 0
      %877 = vmatprep.subr.bf16.mxu0 0
      %878 = vmatpush1.bf16.msra.mxu0 0
      %879 = vmatprep.subr.bf16.mxu0 0
      %880 = vmatpush1.bf16.msra.mxu0 0
      %881 = vmatprep.subr.bf16.mxu0 0
      %882 = vmatpush1.bf16.msra.mxu0 0
      %883 = vmatprep.subr.bf16.mxu0 0
      %884 = vmatpush1.bf16.msra.mxu0 0
      %885 = vmatprep.subr.bf16.mxu0 0
      %886 = vmatpush1.bf16.msra.mxu0 0
      %887 = vmatprep.subr.bf16.mxu0 0
      %888 = vmatpush1.bf16.msra.mxu0 0
      %889 = vmatprep.subr.bf16.mxu0 0
      %890 = vmatpush1.bf16.msra.mxu0 0
      %891 = vmatprep.subr.bf16.mxu0 0
      %892 = vmatpush1.bf16.msra.mxu0 0
      %893 = vmatprep.subr.bf16.mxu0 0
      %894 = vmatpush1.bf16.msra.mxu0 0
      %895 = vmatprep.subr.bf16.mxu0 0
      %896 = vmatpush1.bf16.msra.mxu0 0
      %897 = vmatprep.mubr.bf16.mxu0 0
      %898 = vmatmul.mubr.bf16.gmra.mrb[0].mxu0 %v857
      %v899 = vpop.f32.mrb[0].mxu0
      %v900 = vadd.f32 0.0, %v899
      %v901 = vpop.f32.mrb[0].mxu0
      %v902 = vadd.f32 0.0, %v901
      %v903 = vpop.f32.mrb[0].mxu0
      %v904 = vpop.f32.mrb[0].mxu0
      %905 = vdwg.mxu0
      %v906 = vadd.f32 %v822, %v900
      %v907 = vadd.f32 %v823, %v902
      %908 = vrot.lane.b32.xlu0 %v331, 62
      %v909 = vpop.permute.xlu0 %908
      %910 = vrot.lane.b32.xlu0 %v339, 62
      %v911 = vpop.permute.xlu0 %910
      %912 = vrot.lane.b32.xlu0 %v338, 62
      %v913 = vpop.permute.xlu0 %912
      %vm914 = vcmask 506880
      %v915 = vsel %vm914, %v909, %v911
      %v916 = vsel %vm914, %v911, %v913
      %v918 = vsel %vm349, %v271, 0
      %v921 = vsel %vm353, %v915, 0
      %v924 = vsel %vm353, %v916, 0
      %926 = vmatprep.subr.bf16.mxu0 %v924
      %927 = vmatpush1.bf16.msra.mxu0 %v921
      %928 = vmatprep.subr.bf16.mxu0 0
      %929 = vmatpush1.bf16.msra.mxu0 0
      %930 = vmatprep.subr.bf16.mxu0 0
      %931 = vmatpush1.bf16.msra.mxu0 0
      %932 = vmatprep.subr.bf16.mxu0 0
      %933 = vmatpush1.bf16.msra.mxu0 0
      %934 = vmatprep.subr.bf16.mxu0 0
      %935 = vmatpush1.bf16.msra.mxu0 0
      %936 = vmatprep.subr.bf16.mxu0 0
      %937 = vmatpush1.bf16.msra.mxu0 0
      %938 = vmatprep.subr.bf16.mxu0 0
      %939 = vmatpush1.bf16.msra.mxu0 0
      %940 = vmatprep.subr.bf16.mxu0 0
      %941 = vmatpush1.bf16.msra.mxu0 0
      %942 = vmatprep.subr.bf16.mxu0 0
      %943 = vmatpush1.bf16.msra.mxu0 0
      %944 = vmatprep.subr.bf16.mxu0 0
      %945 = vmatpush1.bf16.msra.mxu0 0
      %946 = vmatprep.subr.bf16.mxu0 0
      %947 = vmatpush1.bf16.msra.mxu0 0
      %948 = vmatprep.subr.bf16.mxu0 0
      %949 = vmatpush1.bf16.msra.mxu0 0
      %950 = vmatprep.subr.bf16.mxu0 0
      %951 = vmatpush1.bf16.msra.mxu0 0
      %952 = vmatprep.subr.bf16.mxu0 0
      %953 = vmatpush1.bf16.msra.mxu0 0
      %954 = vmatprep.subr.bf16.mxu0 0
      %955 = vmatpush1.bf16.msra.mxu0 0
      %956 = vmatprep.subr.bf16.mxu0 0
      %957 = vmatpush1.bf16.msra.mxu0 0
      %958 = vmatprep.mubr.bf16.mxu0 0
      %959 = vmatmul.mubr.bf16.gmra.mrb[0].mxu0 %v918
      %v960 = vpop.f32.mrb[0].mxu0
      %v961 = vadd.f32 0.0, %v960
      %v962 = vpop.f32.mrb[0].mxu0
      %v963 = vadd.f32 0.0, %v962
      %v964 = vpop.f32.mrb[0].mxu0
      %v965 = vpop.f32.mrb[0].mxu0
      %966 = vdwg.mxu0
      %v967 = vadd.f32 %v906, %v961
      %v968 = vadd.f32 %v907, %v963
      %969 = vrot.lane.b32.xlu0 %v507, 68
      %v970 = vpop.permute.xlu0 %969
      %v971 = vrot.slane %v970, 6
      %vm972 = vcmask 556032
      %v973 = vsel %vm972, %v971, %v970
      %v975 = vmul.bf16 %v263, %v973
      %v977 = vcombine.high %v975, %v975
      %v979 = vunpack.c.l.s4 1983009808
      %v980 = vunpack.c.0.s8 %v979
      %v981 = vlaneseq
      %v982 = vshrl.u32 %v981, 7
      %v983 = vsub.s32 %v980, %v982
      %v984 = vrot.slane %v975, %v983
      %v986 = vunpack.c.l.s4 1983009808
      %v987 = vunpack.c.0.s8 %v986
      %v988 = vlaneseq
      %v989 = vshrl.u32 %v988, 7
      %v990 = vsub.s32 %v987, %v989
      %v991 = vrot.slane %v977, %v990
      %v992 = vcombine.high %v984, %v984
      %993 = vrot.lane.b32.xlu0 %v984, 60
      %v994 = vpop.permute.xlu0 %993
      %995 = vrot.lane.b32.xlu0 %v992, 60
      %v996 = vpop.permute.xlu0 %995
      %997 = vrot.lane.b32.xlu0 %v991, 60
      %v998 = vpop.permute.xlu0 %997
      %vm999 = vcmask 490496
      %v1000 = vsel %vm999, %v994, %v996
      %v1001 = vsel %vm999, %v996, %v998
      %v1003 = vsel %vm349, %v272, 0
      %v1006 = vsel %vm353, %v1000, 0
      %v1009 = vsel %vm353, %v1001, 0
      %1011 = vmatprep.subr.bf16.mxu0 %v1009
      %1012 = vmatpush1.bf16.msra.mxu0 %v1006
      %1013 = vmatprep.subr.bf16.mxu0 0
      %1014 = vmatpush1.bf16.msra.mxu0 0
      %1015 = vmatprep.subr.bf16.mxu0 0
      %1016 = vmatpush1.bf16.msra.mxu0 0
      %1017 = vmatprep.subr.bf16.mxu0 0
      %1018 = vmatpush1.bf16.msra.mxu0 0
      %1019 = vmatprep.subr.bf16.mxu0 0
      %1020 = vmatpush1.bf16.msra.mxu0 0
      %1021 = vmatprep.subr.bf16.mxu0 0
      %1022 = vmatpush1.bf16.msra.mxu0 0
      %1023 = vmatprep.subr.bf16.mxu0 0
      %1024 = vmatpush1.bf16.msra.mxu0 0
      %1025 = vmatprep.subr.bf16.mxu0 0
      %1026 = vmatpush1.bf16.msra.mxu0 0
      %1027 = vmatprep.subr.bf16.mxu0 0
      %1028 = vmatpush1.bf16.msra.mxu0 0
      %1029 = vmatprep.subr.bf16.mxu0 0
      %1030 = vmatpush1.bf16.msra.mxu0 0
      %1031 = vmatprep.subr.bf16.mxu0 0
      %1032 = vmatpush1.bf16.msra.mxu0 0
      %1033 = vmatprep.subr.bf16.mxu0 0
      %1034 = vmatpush1.bf16.msra.mxu0 0
      %1035 = vmatprep.subr.bf16.mxu0 0
      %1036 = vmatpush1.bf16.msra.mxu0 0
      %1037 = vmatprep.subr.bf16.mxu0 0
      %1038 = vmatpush1.bf16.msra.mxu0 0
      %1039 = vmatprep.subr.bf16.mxu0 0
      %1040 = vmatpush1.bf16.msra.mxu0 0
      %1041 = vmatprep.subr.bf16.mxu0 0
      %1042 = vmatpush1.bf16.msra.mxu0 0
      %1043 = vmatprep.mubr.bf16.mxu0 0
      %1044 = vmatmul.mubr.bf16.gmra.mrb[0].mxu0 %v1003
      %v1045 = vpop.f32.mrb[0].mxu0
      %v1046 = vadd.f32 0.0, %v1045
      %v1047 = vpop.f32.mrb[0].mxu0
      %v1048 = vadd.f32 0.0, %v1047
      %v1049 = vpop.f32.mrb[0].mxu0
      %v1050 = vpop.f32.mrb[0].mxu0
      %1051 = vdwg.mxu0
      %v1052 = vadd.f32 %v967, %v1046
      %v1053 = vadd.f32 %v968, %v1048
      %v1054 = vld [vmem:[%s2] sm:$0xff]
      %1056 = vset.pattern.permute.xlu0 0
      %1057 = vperm.xlu0 %1056, %v1054
      %v1058 = vpop.permute.xlu0 %1057
      %v1060 = vadd.f32 %v1052, %v1058
      %v1061 = vadd.f32 %v1053, %v1058
      %v1062 = vmax.f32 %v1060, 0.0
      %v1063 = vmax.f32 %v1061, 0.0
      %1064 = vst [vmem:[%s260] sm:$0xff] %v1062
      %1065 = vst [vmem:[%s260 + $0x8] sm:$0xff] %v1063
      %s1066 = smul.u32 2, %s21
      %p1067 = scmp.lt.s32.totalorder %s20, 1
      %s1068 = scalar_select %p1067, %s20, 1
      %p1069 = scmp.lt.s32.totalorder %s1066, 1
      %s1070 = scalar_select %p1069, %s1066, 1
      %s1071 = smul.addr %s1068, 2
      %s1072 = sadd.s32 %s1070, %s1071
      %s1073 = smul.addr %s1072, 8
      %s1074 = scalar_lea.vmem %s5, %s1073
      // Predicated region
      $region41: #{mep_cover_pallas.1} parent=39 // pred_check
        %p1075 = pneg %p160
      $region42: #{mep_cover_pallas.1} parent=39 // pred_check_branch
        %1077 = sbr.rel (%p1075) target = $region44
      $region43: #{mep_cover_pallas.1} parent=39 // pred_region
        %s1078 = smul.u32 2, %s21
      $region44: #{mep_cover_pallas.1} parent=39 // pred_fallthru
        _
    $region40: #{mep_cover_pallas.1} parent=5 // pred_fallthru
      _
    %p1079 = scmp.le.s32.totalorder 2, %s11
    // Predicated region
    $region45: #{mep_cover_pallas.1} parent=5 // pred_check
      %p1080 = pneg %p1079
    $region46: #{mep_cover_pallas.1} parent=5 // pred_check_branch
      %1082 = sbr.rel (%p1080) target = $region48
    $region47: #{mep_cover_pallas.1} parent=5 // pred_region
      %s1083 = ssub.s32 %s11, 2
      // Predicated region
      $region49: #{mep_cover_pallas.1} parent=47 // pred_check
        %p1084 = pneg %p166
      $region50: #{mep_cover_pallas.1} parent=47 // pred_check_branch
        %1086 = sbr.rel (%p1084) target = $region52
      $region51: #{mep_cover_pallas.1} parent=47 // pred_region
        %s1087 = smul.u32 2, %s23
        %p1088 = scmp.lt.s32.totalorder %s22, 1
        %s1089 = scalar_select %p1088, %s22, 1
        %p1090 = scmp.lt.s32.totalorder %s1087, 1
        %s1091 = scalar_select %p1090, %s1087, 1
        %s1092 = smul.addr %s1089, 2
        %s1093 = sadd.s32 %s1091, %s1092
        %s1094 = smul.addr %s1093, 8
        %s1095 = scalar_lea.vmem %s5, %s1094
      $region52: #{mep_cover_pallas.1} parent=47 // pred_fallthru
        _
    $region48: #{mep_cover_pallas.1} parent=5 // pred_fallthru
      _
  $region6: #{mep_cover_pallas.1} parent=0 // loop_footer
    %s15 = sadd.s32 1, %s11
  $region7: #{mep_cover_pallas.1} parent=0 // loop_footer_branch
    %10 = sbr.rel target = $region3
  $region8: #{mep_cover_pallas.1} parent=0 // loop_exit
    _

</llo_original>
